<compile_context>
chip_gen: v6e
topology: v6e:2x2x1
jax: 0.10.0
libtpu: 0.0.40
codegen_flags: <defaults>
</compile_context>

<pallas_src>
import functools

import jax
import jax.numpy as jnp
from jax.experimental import pallas as pl
from jax.experimental.pallas import tpu as pltpu


def _round_up(x, m):
    return ((x + m - 1) // m) * m


def _cdiv(a, b):
    return -(-a // b)


@functools.lru_cache(maxsize=1)
def _vmem_budget_bytes():
    """Per-generation VMEM budget: 3/4 of physical capacity.

    ~48 MiB on v7x (64 MiB physical), ~96 MiB on v5e/v6e (128 MiB physical).
    Falls back to the most constrained generation if the query fails.
    """
    try:
        cap = int(pltpu.get_tpu_info().vmem_capacity_bytes)
    except Exception:  # not a TPU / older API — assume v7x-sized VMEM
        cap = 64 * 1024 * 1024
    return (cap * 3) // 4


def _select_tiling(n, x_dim, hidden, y_out, csz, osz, vmem_budget,
                   max_tile_n=None, batch=1):
    """Pick (tile_n, num_tiles) so padding is small and VMEM fits.

    Per-point live-byte model (cast fused into ReLU, so one compute-dtype copy
    plus one f32 accumulator of an (H, TN) activation is live at a time; input
    and output blocks are double-buffered by the pipeline):
        per_point ~= (2*csz + 8)*H + 2*csz*x_dim + (2*osz + 4)*y_out
    Constant residents (weights/biases, double-buffered by the pipeline even
    though their block index never changes) are subtracted from the budget.
    """
    n128 = _round_up(max(n, 1), 128)
    n_units = n128 // 128

    weight_bytes = 2 * ((hidden * x_dim + hidden * hidden + y_out * hidden) * csz
                        + (2 * hidden + y_out) * 4 + hidden * 4)
    per_point = (2 * csz + 8) * hidden + 2 * csz * x_dim + (2 * osz + 4) * y_out
    avail = max(vmem_budget - weight_bytes, 1 << 20)

    tn_max_units = max(1, (avail // per_point) // 128)
    if max_tile_n is not None:
        tn_max_units = max(1, min(tn_max_units, _round_up(max_tile_n, 128) // 128))

    num_tiles = _cdiv(n_units, tn_max_units)
    # Megacore balance: avoid a 1x1 grid on multi-TC chips when there is
    # enough work to split.
    if batch * num_tiles < 2 and n_units >= 2:
        num_tiles = 2
    tile_units = _cdiv(n_units, num_tiles)
    return tile_units * 128, num_tiles


def _np_decoder_kernel(xT_ref, zb_ref, w1xT_ref, w2T_ref, b2_ref,
                       w3T_ref, b3_ref, outT_ref):
    """One (batch, point-tile) step of the 3-layer MLP, feature-major layout.

    xT_ref   : (1, x_dim, TN)  compute dtype  -- target points, points on lanes
    zb_ref   : (1, H, 1)       f32            -- z_sample @ W1z + b1 (per batch)
    w1xT_ref : (H, x_dim)      compute dtype
    w2T_ref  : (H, H)          compute dtype
    b2_ref   : (H, 1)          f32
    w3T_ref  : (Y, H)          compute dtype
    b3_ref   : (Y, 1)          f32
    outT_ref : (1, Y, TN)      output dtype   -- lane-dense store
    """
    xT = xT_ref[0]                                            # (x_dim, TN)
    w2T = w2T_ref[...]
    w3T = w3T_ref[...]

    # Layer 1: W1x^T @ x; z-contribution and b1 folded into zb.  Bias + ReLU
    # run on the f32 accumulator; the downcast is fused into the same pass so
    # only one copy of the post-activation stays live.
    h = jnp.dot(w1xT_ref[...], xT, preferred_element_type=jnp.float32)
    h = jnp.maximum(h + zb_ref[0], 0.0).astype(w2T.dtype)     # (H, TN)

    # Layer 2.
    h = jnp.dot(w2T, h, preferred_element_type=jnp.float32)
    h = jnp.maximum(h + b2_ref[...], 0.0).astype(w3T.dtype)   # (H, TN)

    # Layer 3 (no activation); result is (Y, TN) -> lane-dense store.
    y = jnp.dot(w3T, h, preferred_element_type=jnp.float32) + b3_ref[...]
    outT_ref[0] = y.astype(outT_ref.dtype)


@functools.partial(jax.jit, static_argnames=("max_tile_n", "compute_dtype"))
def np_decoder_forward(z_sample, x_target, params, *, max_tile_n=None,
                       compute_dtype=jnp.bfloat16):
    """Pallas implementation of NPDecoder.forward.

    out[b, n, :] = MLP(concat(z_sample[b], x_target[b, n]))
    """
    w1, b1, w2, b2, w3, b3 = params
    B, N, x_dim = x_target.shape
    z_dim = z_sample.shape[-1]
    hidden = w1.shape[1]
    y_out = w3.shape[1]
    out_dtype = x_target.dtype

    csz = jnp.dtype(compute_dtype).itemsize
    osz = jnp.dtype(out_dtype).itemsize
    vmem_budget = _vmem_budget_bytes()
    tile_n, num_tiles = _select_tiling(
        N, x_dim, hidden, y_out, csz, osz, vmem_budget,
        max_tile_n=max_tile_n, batch=B)
    n_pad = tile_n * num_tiles

    # ---- Tiny JAX-side prep (no (B*N, z+x) concat round-trip through HBM) --
    # Split W1: per-batch z contribution computed once, broadcast in-kernel.
    w1z = w1[:z_dim].astype(jnp.float32)                      # (z_dim, H)
    w1x = w1[z_dim:]                                          # (x_dim, H)
    zb = z_sample.astype(jnp.float32) @ w1z + b1.astype(jnp.float32)  # (B, H)
    zb = zb[:, :, None]                                       # (B, H, 1) f32

    # Feature-major activations: points -> lanes.  Transpose + pad + cast fuse
    # into one XLA pass over x_target (see TODO at top for removing it).
    xT = jnp.swapaxes(x_target, 1, 2).astype(compute_dtype)   # (B, x_dim, N)
    if n_pad != N:
        xT = jnp.pad(xT, ((0, 0), (0, 0), (0, n_pad - N)))

    w1xT = w1x.T.astype(compute_dtype)                        # (H, x_dim)
    w2T = w2.T.astype(compute_dtype)                          # (H, H)
    w3T = w3.T.astype(compute_dtype)                          # (Y, H)
    b2c = b2.astype(jnp.float32).reshape(hidden, 1)
    b3c = b3.astype(jnp.float32).reshape(y_out, 1)

    grid = (B, num_tiles)
    const = lambda shape: pl.BlockSpec(shape, lambda b, i: (0, 0))

    outT = pl.pallas_call(
        _np_decoder_kernel,
        out_shape=jax.ShapeDtypeStruct((B, y_out, n_pad), out_dtype),
        grid=grid,
        in_specs=[
            pl.BlockSpec((1, x_dim, tile_n), lambda b, i: (b, 0, i)),  # xT
            pl.BlockSpec((1, hidden, 1), lambda b, i: (b, 0, 0)),      # zb
            const((hidden, x_dim)),                                    # W1x^T
            const((hidden, hidden)),                                   # W2^T
            const((hidden, 1)),                                        # b2
            const((y_out, hidden)),                                    # W3^T
            const((y_out, 1)),                                         # b3
        ],
        out_specs=pl.BlockSpec((1, y_out, tile_n), lambda b, i: (b, 0, i)),
        compiler_params=pltpu.CompilerParams(
            dimension_semantics=("parallel", "parallel"),
            vmem_limit_bytes=int(vmem_budget)),
    )(xT, zb, w1xT, w2T, b2c, w3T, b3c)

    # (B, Y, n_pad) -> (B, N, Y); trailing Y axis is tiny so this is cheap.
    return jnp.swapaxes(outT, 1, 2)[:, :N, :]


def init_params(key, x_dim, z_dim, hidden_dim, y_dim_out, dtype=jnp.float32):
    """Deterministic init mirroring the nn.Linear shapes of NPDecoder.fc.

    Weights stored as (in_features, out_features) so the math is x @ W.
    """
    d_in = z_dim + x_dim
    k1, k2, k3, k4, k5, k6 = jax.random.split(key, 6)

    def lin(kw, kb, fan_in, fan_out):
        bound = 1.0 / jnp.sqrt(fan_in)
        w = jax.random.uniform(kw, (fan_in, fan_out), dtype, -bound, bound)
        b = jax.random.uniform(kb, (fan_out,), dtype, -bound, bound)
        return w, b

    w1, b1 = lin(k1, k2, d_in, hidden_dim)
    w2, b2 = lin(k3, k4, hidden_dim, hidden_dim)
    w3, b3 = lin(k5, k6, hidden_dim, y_dim_out)
    return (w1, b1, w2, b2, w3, b3)


def np_decoder_reference(z_sample, x_target, params):
    """Pure-JAX reference matching the PyTorch forward exactly (f32)."""
    w1, b1, w2, b2, w3, b3 = params
    B, N, _ = x_target.shape
    z_rep = jnp.broadcast_to(z_sample[:, None, :],
                             (B, N, z_sample.shape[-1]))
    zx = jnp.concatenate([z_rep, x_target], axis=-1)
    h = jax.nn.relu(zx @ w1 + b1)
    h = jax.nn.relu(h @ w2 + b2)
    return h @ w3 + b3


if __name__ == "__main__":
    # Small shapes implied by the forward pass.
    B, N = 2, 8          # batch, num target points
    x_dim = 4
    z_dim = 8
    hidden_dim = 32
    y_dim_out = 2

    key = jax.random.PRNGKey(0)
    k_z, k_x, k_p = jax.random.split(key, 3)

    z_sample = jax.random.normal(k_z, (B, z_dim), dtype=jnp.float32)
    x_target = jax.random.normal(k_x, (B, N, x_dim), dtype=jnp.float32)
    params = init_params(k_p, x_dim, z_dim, hidden_dim, y_dim_out)

    ref = np_decoder_reference(z_sample, x_target, params)

    # Exact-path check: f32 compute dtype, tight tolerance.
    out_f32 = np_decoder_forward(z_sample, x_target, params,
                                 compute_dtype=jnp.float32)
    out_f32 = jax.block_until_ready(out_f32)
    assert out_f32.shape == (B, N, y_dim_out), out_f32.shape
    assert jnp.allclose(out_f32, ref, atol=1e-5, rtol=1e-5), (
        float(jnp.max(jnp.abs(out_f32 - ref))))

    # Default fast path: bf16 HBM tensors, f32 MXU accumulation.
    out = np_decoder_forward(z_sample, x_target, params)
    out = jax.block_until_ready(out)
    assert out.shape == (B, N, y_dim_out), out.shape
    err = float(jnp.max(jnp.abs(out.astype(jnp.float32) - ref)))
    assert jnp.allclose(out.astype(jnp.float32), ref, atol=5e-2, rtol=5e-2), err

    # Exercise the multi-tile / larger-N path once to ensure tiling logic runs.
    N2 = 300
    x_target2 = jax.random.normal(k_x, (B, N2, x_dim), dtype=jnp.float32)
    ref2 = np_decoder_reference(z_sample, x_target2, params)
    out2 = np_decoder_forward(z_sample, x_target2, params,
                              compute_dtype=jnp.float32)
    out2 = jax.block_until_ready(out2)
    assert out2.shape == (B, N2, y_dim_out), out2.shape
    assert jnp.allclose(out2, ref2, atol=1e-5, rtol=1e-5), (
        float(jnp.max(jnp.abs(out2 - ref2))))

    print("KERNEL_OK")
</pallas_src>

<mosaic_0001>
module attributes {stable_mosaic.version = 11 : i64} {
  func.func @_np_decoder_kernel(%arg0: i32, %arg1: i32, %arg2: memref<1x4x128xf32, #tpu.memory_space<vmem>>, %arg3: memref<1x32x1xf32, #tpu.memory_space<vmem>>, %arg4: memref<32x4xf32, #tpu.memory_space<vmem>>, %arg5: memref<32x32xf32, #tpu.memory_space<vmem>>, %arg6: memref<32x1xf32, #tpu.memory_space<vmem>>, %arg7: memref<2x32xf32, #tpu.memory_space<vmem>>, %arg8: memref<2x1xf32, #tpu.memory_space<vmem>>, %arg9: memref<1x2x128xf32, #tpu.memory_space<vmem>>) attributes {dimension_semantics = [#tpu.dimension_semantics<parallel>, #tpu.dimension_semantics<parallel>], iteration_bounds = array<i64: 2, 1>, scalar_prefetch = 0 : i64, scratch_operands = 0 : i64, tpu.core_type = #tpu.core_type<tc>, window_params = [{transform_indices = @transform_0, window_bounds = array<i64: 1, 4, 128>}, {transform_indices = @transform_1, window_bounds = array<i64: 1, 32, 1>}, {pipeline_mode = #tpu.pipeline_mode<synchronous>, transform_indices = @transform_2, window_bounds = array<i64: 32, 4>}, {pipeline_mode = #tpu.pipeline_mode<synchronous>, transform_indices = @transform_3, window_bounds = array<i64: 32, 32>}, {pipeline_mode = #tpu.pipeline_mode<synchronous>, transform_indices = @transform_4, window_bounds = array<i64: 32, 1>}, {pipeline_mode = #tpu.pipeline_mode<synchronous>, transform_indices = @transform_5, window_bounds = array<i64: 2, 32>}, {pipeline_mode = #tpu.pipeline_mode<synchronous>, transform_indices = @transform_6, window_bounds = array<i64: 2, 1>}, {transform_indices = @transform_7, window_bounds = array<i64: 1, 2, 128>}]} {
    %c0 = arith.constant 0 : index
    %c0_0 = arith.constant 0 : index
    %c0_1 = arith.constant 0 : index
    %0 = vector.load %arg2[%c0, %c0_0, %c0_1] : memref<1x4x128xf32, #tpu.memory_space<vmem>>, vector<1x4x128xf32>
    %1 = vector.shape_cast %0 : vector<1x4x128xf32> to vector<4x128xf32>
    %c0_2 = arith.constant 0 : index
    %c0_3 = arith.constant 0 : index
    %2 = vector.load %arg5[%c0_2, %c0_3] : memref<32x32xf32, #tpu.memory_space<vmem>>, vector<32x32xf32>
    %c0_4 = arith.constant 0 : index
    %c0_5 = arith.constant 0 : index
    %3 = vector.load %arg7[%c0_4, %c0_5] : memref<2x32xf32, #tpu.memory_space<vmem>>, vector<2x32xf32>
    %c0_6 = arith.constant 0 : index
    %c0_7 = arith.constant 0 : index
    %4 = vector.load %arg4[%c0_6, %c0_7] : memref<32x4xf32, #tpu.memory_space<vmem>>, vector<32x4xf32>
    %cst = arith.constant dense<0.000000e+00> : vector<32x128xf32>
    %5 = tpu.matmul %4, %1, %cst {dimension_numbers = #tpu.dot_dimension_numbers<[1], [0], [0], [1], [0, 0, 1, 1], [], []>} : vector<32x4xf32>, vector<4x128xf32>, vector<32x128xf32> -> vector<32x128xf32>
    %c0_8 = arith.constant 0 : index
    %c0_9 = arith.constant 0 : index
    %c0_10 = arith.constant 0 : index
    %6 = vector.load %arg3[%c0_8, %c0_9, %c0_10] : memref<1x32x1xf32, #tpu.memory_space<vmem>>, vector<1x32x1xf32>
    %7 = vector.shape_cast %6 : vector<1x32x1xf32> to vector<32x1xf32>
    %8 = vector.broadcast %7 : vector<32x1xf32> to vector<32x128xf32>
    %9 = arith.addf %5, %8 : vector<32x128xf32>
    %cst_11 = arith.constant 0.000000e+00 : f32
    %10 = vector.broadcast %cst_11 : f32 to vector<32x128xf32>
    %11 = arith.maximumf %9, %10 : vector<32x128xf32>
    %cst_12 = arith.constant dense<0.000000e+00> : vector<32x128xf32>
    %12 = tpu.matmul %2, %11, %cst_12 {dimension_numbers = #tpu.dot_dimension_numbers<[1], [0], [0], [1], [0, 0, 1, 1], [], []>} : vector<32x32xf32>, vector<32x128xf32>, vector<32x128xf32> -> vector<32x128xf32>
    %c0_13 = arith.constant 0 : index
    %c0_14 = arith.constant 0 : index
    %13 = vector.load %arg6[%c0_13, %c0_14] : memref<32x1xf32, #tpu.memory_space<vmem>>, vector<32x1xf32>
    %14 = vector.broadcast %13 : vector<32x1xf32> to vector<32x128xf32>
    %15 = arith.addf %12, %14 : vector<32x128xf32>
    %cst_15 = arith.constant 0.000000e+00 : f32
    %16 = vector.broadcast %cst_15 : f32 to vector<32x128xf32>
    %17 = arith.maximumf %15, %16 : vector<32x128xf32>
    %cst_16 = arith.constant dense<0.000000e+00> : vector<2x128xf32>
    %18 = tpu.matmul %3, %17, %cst_16 {dimension_numbers = #tpu.dot_dimension_numbers<[1], [0], [0], [1], [0, 0, 1, 1], [], []>} : vector<2x32xf32>, vector<32x128xf32>, vector<2x128xf32> -> vector<2x128xf32>
    %c0_17 = arith.constant 0 : index
    %c0_18 = arith.constant 0 : index
    %19 = vector.load %arg8[%c0_17, %c0_18] : memref<2x1xf32, #tpu.memory_space<vmem>>, vector<2x1xf32>
    %20 = vector.broadcast %19 : vector<2x1xf32> to vector<2x128xf32>
    %21 = arith.addf %18, %20 : vector<2x128xf32>
    %c0_19 = arith.constant 0 : index
    %c0_20 = arith.constant 0 : index
    %c0_21 = arith.constant 0 : index
    %22 = vector.load %arg9[%c0_19, %c0_20, %c0_21] : memref<1x2x128xf32, #tpu.memory_space<vmem>>, vector<1x2x128xf32>
    %23 = vector.shape_cast %22 : vector<1x2x128xf32> to vector<2x128xf32>
    %24 = vector.shape_cast %21 : vector<2x128xf32> to vector<1x2x128xf32>
    tpu.vector_store %arg9[%c0_19, %c0_20, %c0_21], %24 {strides = array<i32>} : memref<1x2x128xf32, #tpu.memory_space<vmem>>, vector<1x2x128xf32>,
    return
  }
  func.func @transform_0(%arg0: i32, %arg1: i32) -> (i32, i32, i32) {
    %c0_i32 = arith.constant 0 : i32
    %c0_i32_0 = arith.constant 0 : i32
    return %arg0, %c0_i32, %arg1 : i32, i32, i32
  }
  func.func @transform_1(%arg0: i32, %arg1: i32) -> (i32, i32, i32) {
    %c0_i32 = arith.constant 0 : i32
    %c0_i32_0 = arith.constant 0 : i32
    %c0_i32_1 = arith.constant 0 : i32
    return %arg0, %c0_i32, %c0_i32_0 : i32, i32, i32
  }
  func.func @transform_2(%arg0: i32, %arg1: i32) -> (i32, i32) {
    %c0_i32 = arith.constant 0 : i32
    %c0_i32_0 = arith.constant 0 : i32
    %c0_i32_1 = arith.constant 0 : i32
    return %c0_i32, %c0_i32_0 : i32, i32
  }
  func.func @transform_3(%arg0: i32, %arg1: i32) -> (i32, i32) {
    %c0_i32 = arith.constant 0 : i32
    %c0_i32_0 = arith.constant 0 : i32
    %c0_i32_1 = arith.constant 0 : i32
    return %c0_i32, %c0_i32_0 : i32, i32
  }
  func.func @transform_4(%arg0: i32, %arg1: i32) -> (i32, i32) {
    %c0_i32 = arith.constant 0 : i32
    %c0_i32_0 = arith.constant 0 : i32
    %c0_i32_1 = arith.constant 0 : i32
    return %c0_i32, %c0_i32_0 : i32, i32
  }
  func.func @transform_5(%arg0: i32, %arg1: i32) -> (i32, i32) {
    %c0_i32 = arith.constant 0 : i32
    %c0_i32_0 = arith.constant 0 : i32
    %c0_i32_1 = arith.constant 0 : i32
    return %c0_i32, %c0_i32_0 : i32, i32
  }
  func.func @transform_6(%arg0: i32, %arg1: i32) -> (i32, i32) {
    %c0_i32 = arith.constant 0 : i32
    %c0_i32_0 = arith.constant 0 : i32
    %c0_i32_1 = arith.constant 0 : i32
    return %c0_i32, %c0_i32_0 : i32, i32
  }
  func.func @transform_7(%arg0: i32, %arg1: i32) -> (i32, i32, i32) {
    %c0_i32 = arith.constant 0 : i32
    %c0_i32_0 = arith.constant 0 : i32
    return %arg0, %c0_i32, %arg1 : i32, i32, i32
  }
}

</mosaic_0001>

<llo_original>
// kernel: np_decoder_forward.1
$region0: #{np_decoder_forward.1}
  #allocation0 [shape = 'u32[]', space=smem, size = 0x4, offset = 0x4, fixed_abs, tag = 'smem constant byte address 0x4 - core index']
  #allocation1 [shape = 'u32[144,128]{1,0:T(1,128)}', space=vmem, size = 0x12000, scoped, tag = 'internal scratch']
  %s0 = inlined_call_operand.vmem [shape: f32[2,4,128], index: 0, kind: input, shape index: {}]
  %s1 = inlined_call_operand.vmem [shape: f32[2,32,1], index: 1, kind: input, shape index: {}]
  %s2 = inlined_call_operand.vmem [shape: f32[32,4], index: 2, kind: input, shape index: {}]
  %s3 = inlined_call_operand.vmem [shape: f32[32,32], index: 3, kind: input, shape index: {}]
  %s4 = inlined_call_operand.vmem [shape: f32[32,1], index: 4, kind: input, shape index: {}]
  %s5 = inlined_call_operand.vmem [shape: f32[2,32], index: 5, kind: input, shape index: {}]
  %s6 = inlined_call_operand.vmem [shape: f32[2,1], index: 6, kind: input, shape index: {}]
  %s7 = inlined_call_operand.hbm [shape: f32[2,2,128], index: 7, kind: output, shape index: {}]
  %s8 = sld [smem:[#allocation0]]
  $region61: #{np_decoder_forward.1} parent=0
    _
  %s10 = ssub.s32 1, %s8
  %s11 = scalar_select 0, %s10, %s8
  $region1: #{np_decoder_forward.1} parent=0
    #allocation2 [shape = 'u8[2048]{0}', space=vmem, size = 0x800, scoped, tag = 'output window, operand 0']
    #allocation3 [shape = 's32[2]{0}', space=sflag, size = 0x8, scoped, tag = 'scoped memory for np_decoder_forward.1']
    %12 = vsyncpa [#allocation3], 0
    %s13 = scalar_lea.sflag [#allocation3], 1
    %14 = vsyncpa %s13, 0
    loop: start=0, step=1, limit=4
    $region2: #{np_decoder_forward.1} parent=1 // loop_pre_header
      _
    $region3: #{np_decoder_forward.1} parent=1 // loop_header
      %s16 = sphi 0, %s20
      %p17 = scmp.ge.s32.totalorder %s16, 4
      %s23 = sphi 0, %s35
      %s24 = sphi 0, %s31
      %s25 = sphi 0, %s23
      %s26 = sphi 0, %s24
      %s27 = sphi 0, %s25
      %s28 = sphi 0, %s26
      %s40 = sphi 0, %s42
      %s43 = sphi 0, %s40
      %s44 = sphi 0, %s43
      %s60 = sphi 0, %s44
      %s66 = sphi 0, %s68
      %s69 = sphi 0, %s66
      %s70 = sphi 0, %s69
      %s86 = sphi 0, %s70
      %s90 = sphi 0, %s90
      %s92 = sphi 0, %s90
      %s93 = sphi 0, %s92
      %s107 = sphi 0, %s93
      %s111 = sphi 0, %s111
      %s113 = sphi 0, %s111
      %s114 = sphi 0, %s113
      %s128 = sphi 0, %s114
      %s132 = sphi 0, %s132
      %s134 = sphi 0, %s132
      %s135 = sphi 0, %s134
      %s149 = sphi 0, %s135
      %s153 = sphi 0, %s153
      %s155 = sphi 0, %s153
      %s156 = sphi 0, %s155
      %s170 = sphi 0, %s156
      %s174 = sphi 0, %s174
      %s176 = sphi 0, %s174
      %s177 = sphi 0, %s176
      %s191 = sphi 0, %s177
      %s199 = sphi 0, %s201
      %s202 = sphi 0, %s199
      %s203 = sphi 0, %s202
      %s219 = sphi 0, %s203
    $region4: #{np_decoder_forward.1} parent=1 // loop_header_branch
      %19 = sbr.rel (%p17) target = $region8
    $region5: #{np_decoder_forward.1} parent=1 // loop_body
      %s21 = ssub.s32 %s16, 1
      %s22 = ssub.s32 %s16, 2
      %s29 = sadd.s32 1, %s24
      %p30 = scmp.ge.s32.totalorder %s29, 1
      %s31 = scalar_select %p30, 0, %s29
      %s32 = sadd.s32 1, %s23
      %s33 = scalar_select %p30, %s32, %s23
      %p34 = scmp.ge.s32.totalorder %s33, 2
      %s35 = scalar_select %p34, 0, %s33
      %s36 = ssub.s32 %s23, %s35
      %s37 = ssub.s32 %s24, %s31
      %s38 = sor.u32 %s36, %s37
      %p39 = scmp.eq.s32.totalorder %s38, 0
      %s41 = sadd.s32 %s40, 1
      %s42 = scalar_select %p39, %s40, %s41
      %p45 = pneg %p39
      %p46 = scmp.eq.s32.totalorder %s16, 1
      %p47 = por %p45, %p46
      %p48 = scmp.ne.s32.totalorder %s40, %s43
      %p49 = scmp.eq.s32.totalorder %s16, 0
      %p50 = por %p48, %p49
      %p51 = scmp.ne.s32.totalorder %s40, %s43
      %p52 = scmp.eq.s32.totalorder %s21, 1
      %p53 = por %p51, %p52
      %p54 = scmp.ne.s32.totalorder %s43, %s44
      %p55 = scmp.eq.s32.totalorder %s21, 0
      %p56 = por %p54, %p55
      %p57 = scmp.ne.s32.totalorder %s43, %s44
      %p58 = scmp.eq.s32.totalorder %s22, 1
      %p59 = por %p57, %p58
      %p61 = scmp.ne.s32.totalorder %s44, %s60
      %p62 = scmp.eq.s32.totalorder %s22, 0
      %p63 = por %p61, %p62
      %s64 = ssub.s32 %s23, %s35
      %p65 = scmp.eq.s32.totalorder %s64, 0
      %s67 = sadd.s32 %s66, 1
      %s68 = scalar_select %p65, %s66, %s67
      %p71 = pneg %p65
      %p72 = scmp.eq.s32.totalorder %s16, 1
      %p73 = por %p71, %p72
      %p74 = scmp.ne.s32.totalorder %s66, %s69
      %p75 = scmp.eq.s32.totalorder %s16, 0
      %p76 = por %p74, %p75
      %p77 = scmp.ne.s32.totalorder %s66, %s69
      %p78 = scmp.eq.s32.totalorder %s21, 1
      %p79 = por %p77, %p78
      %p80 = scmp.ne.s32.totalorder %s69, %s70
      %p81 = scmp.eq.s32.totalorder %s21, 0
      %p82 = por %p80, %p81
      %p83 = scmp.ne.s32.totalorder %s69, %s70
      %p84 = scmp.eq.s32.totalorder %s22, 1
      %p85 = por %p83, %p84
      %p87 = scmp.ne.s32.totalorder %s70, %s86
      %p88 = scmp.eq.s32.totalorder %s22, 0
      %p89 = por %p87, %p88
      %s91 = sadd.s32 %s90, 1
      %p94 = scmp.eq.s32.totalorder %s16, 1
      %p95 = scmp.ne.s32.totalorder %s90, %s92
      %p96 = scmp.eq.s32.totalorder %s16, 0
      %p97 = por %p95, %p96
      %p98 = scmp.ne.s32.totalorder %s90, %s92
      %p99 = scmp.eq.s32.totalorder %s21, 1
      %p100 = por %p98, %p99
      %p101 = scmp.ne.s32.totalorder %s92, %s93
      %p102 = scmp.eq.s32.totalorder %s21, 0
      %p103 = por %p101, %p102
      %p104 = scmp.ne.s32.totalorder %s92, %s93
      %p105 = scmp.eq.s32.totalorder %s22, 1
      %p106 = por %p104, %p105
      %p108 = scmp.ne.s32.totalorder %s93, %s107
      %p109 = scmp.eq.s32.totalorder %s22, 0
      %p110 = por %p108, %p109
      %s112 = sadd.s32 %s111, 1
      %p115 = scmp.eq.s32.totalorder %s16, 1
      %p116 = scmp.ne.s32.totalorder %s111, %s113
      %p117 = scmp.eq.s32.totalorder %s16, 0
      %p118 = por %p116, %p117
      %p119 = scmp.ne.s32.totalorder %s111, %s113
      %p120 = scmp.eq.s32.totalorder %s21, 1
      %p121 = por %p119, %p120
      %p122 = scmp.ne.s32.totalorder %s113, %s114
      %p123 = scmp.eq.s32.totalorder %s21, 0
      %p124 = por %p122, %p123
      %p125 = scmp.ne.s32.totalorder %s113, %s114
      %p126 = scmp.eq.s32.totalorder %s22, 1
      %p127 = por %p125, %p126
      %p129 = scmp.ne.s32.totalorder %s114, %s128
      %p130 = scmp.eq.s32.totalorder %s22, 0
      %p131 = por %p129, %p130
      %s133 = sadd.s32 %s132, 1
      %p136 = scmp.eq.s32.totalorder %s16, 1
      %p137 = scmp.ne.s32.totalorder %s132, %s134
      %p138 = scmp.eq.s32.totalorder %s16, 0
      %p139 = por %p137, %p138
      %p140 = scmp.ne.s32.totalorder %s132, %s134
      %p141 = scmp.eq.s32.totalorder %s21, 1
      %p142 = por %p140, %p141
      %p143 = scmp.ne.s32.totalorder %s134, %s135
      %p144 = scmp.eq.s32.totalorder %s21, 0
      %p145 = por %p143, %p144
      %p146 = scmp.ne.s32.totalorder %s134, %s135
      %p147 = scmp.eq.s32.totalorder %s22, 1
      %p148 = por %p146, %p147
      %p150 = scmp.ne.s32.totalorder %s135, %s149
      %p151 = scmp.eq.s32.totalorder %s22, 0
      %p152 = por %p150, %p151
      %s154 = sadd.s32 %s153, 1
      %p157 = scmp.eq.s32.totalorder %s16, 1
      %p158 = scmp.ne.s32.totalorder %s153, %s155
      %p159 = scmp.eq.s32.totalorder %s16, 0
      %p160 = por %p158, %p159
      %p161 = scmp.ne.s32.totalorder %s153, %s155
      %p162 = scmp.eq.s32.totalorder %s21, 1
      %p163 = por %p161, %p162
      %p164 = scmp.ne.s32.totalorder %s155, %s156
      %p165 = scmp.eq.s32.totalorder %s21, 0
      %p166 = por %p164, %p165
      %p167 = scmp.ne.s32.totalorder %s155, %s156
      %p168 = scmp.eq.s32.totalorder %s22, 1
      %p169 = por %p167, %p168
      %p171 = scmp.ne.s32.totalorder %s156, %s170
      %p172 = scmp.eq.s32.totalorder %s22, 0
      %p173 = por %p171, %p172
      %s175 = sadd.s32 %s174, 1
      %p178 = scmp.eq.s32.totalorder %s16, 1
      %p179 = scmp.ne.s32.totalorder %s174, %s176
      %p180 = scmp.eq.s32.totalorder %s16, 0
      %p181 = por %p179, %p180
      %p182 = scmp.ne.s32.totalorder %s174, %s176
      %p183 = scmp.eq.s32.totalorder %s21, 1
      %p184 = por %p182, %p183
      %p185 = scmp.ne.s32.totalorder %s176, %s177
      %p186 = scmp.eq.s32.totalorder %s21, 0
      %p187 = por %p185, %p186
      %p188 = scmp.ne.s32.totalorder %s176, %s177
      %p189 = scmp.eq.s32.totalorder %s22, 1
      %p190 = por %p188, %p189
      %p192 = scmp.ne.s32.totalorder %s177, %s191
      %p193 = scmp.eq.s32.totalorder %s22, 0
      %p194 = por %p192, %p193
      %s195 = ssub.s32 %s23, %s35
      %s196 = ssub.s32 %s24, %s31
      %s197 = sor.u32 %s195, %s196
      %p198 = scmp.eq.s32.totalorder %s197, 0
      %s200 = sadd.s32 %s199, 1
      %s201 = scalar_select %p198, %s199, %s200
      %p204 = pneg %p198
      %p205 = scmp.eq.s32.totalorder %s16, 1
      %p206 = por %p204, %p205
      %p207 = scmp.ne.s32.totalorder %s199, %s202
      %p208 = scmp.eq.s32.totalorder %s16, 0
      %p209 = por %p207, %p208
      %p210 = scmp.ne.s32.totalorder %s199, %s202
      %p211 = scmp.eq.s32.totalorder %s21, 1
      %p212 = por %p210, %p211
      %p213 = scmp.ne.s32.totalorder %s202, %s203
      %p214 = scmp.eq.s32.totalorder %s21, 0
      %p215 = por %p213, %p214
      %p216 = scmp.ne.s32.totalorder %s202, %s203
      %p217 = scmp.eq.s32.totalorder %s22, 1
      %p218 = por %p216, %p217
      %p220 = scmp.ne.s32.totalorder %s203, %s219
      %p221 = scmp.eq.s32.totalorder %s22, 0
      %p222 = por %p220, %p221
      %p223 = scmp.le.s32.totalorder 1, %s16
      %p224 = scmp.lt.s32.totalorder %s16, 3
      %p225 = pnand %p223, %p224
      %p226 = pneg %p225
      // Predicated region
      $region9: #{np_decoder_forward.1} parent=5 // pred_check
        _
      $region10: #{np_decoder_forward.1} parent=5 // pred_check_branch
        %228 = sbr.rel (%p225) target = $region12
      $region11: #{np_decoder_forward.1} parent=5 // pred_region
        %s229 = ssub.s32 %s16, 1
        // Predicated region
        $region13: #{np_decoder_forward.1} parent=11 // pred_check
          %p230 = pneg %p103
        $region14: #{np_decoder_forward.1} parent=11 // pred_check_branch
          %232 = sbr.rel (%p230) target = $region16
        $region15: #{np_decoder_forward.1} parent=11 // pred_region
          _
        $region16: #{np_decoder_forward.1} parent=11 // pred_fallthru
          _
        // Predicated region
        $region17: #{np_decoder_forward.1} parent=11 // pred_check
          %p233 = pneg %p124
        $region18: #{np_decoder_forward.1} parent=11 // pred_check_branch
          %235 = sbr.rel (%p233) target = $region20
        $region19: #{np_decoder_forward.1} parent=11 // pred_region
          _
        $region20: #{np_decoder_forward.1} parent=11 // pred_fallthru
          _
        // Predicated region
        $region21: #{np_decoder_forward.1} parent=11 // pred_check
          %p236 = pneg %p145
        $region22: #{np_decoder_forward.1} parent=11 // pred_check_branch
          %238 = sbr.rel (%p236) target = $region24
        $region23: #{np_decoder_forward.1} parent=11 // pred_region
          _
        $region24: #{np_decoder_forward.1} parent=11 // pred_fallthru
          _
        // Predicated region
        $region25: #{np_decoder_forward.1} parent=11 // pred_check
          %p239 = pneg %p166
        $region26: #{np_decoder_forward.1} parent=11 // pred_check_branch
          %241 = sbr.rel (%p239) target = $region28
        $region27: #{np_decoder_forward.1} parent=11 // pred_region
          _
        $region28: #{np_decoder_forward.1} parent=11 // pred_fallthru
          _
        // Predicated region
        $region29: #{np_decoder_forward.1} parent=11 // pred_check
          %p242 = pneg %p187
        $region30: #{np_decoder_forward.1} parent=11 // pred_check_branch
          %244 = sbr.rel (%p242) target = $region32
        $region31: #{np_decoder_forward.1} parent=11 // pred_region
          _
        $region32: #{np_decoder_forward.1} parent=11 // pred_fallthru
          _
      $region12: #{np_decoder_forward.1} parent=5 // pred_fallthru
        _
      %p245 = scmp.lt.s32.totalorder %s16, 2
      // Predicated region
      $region33: #{np_decoder_forward.1} parent=5 // pred_check
        %p246 = pneg %p245
      $region34: #{np_decoder_forward.1} parent=5 // pred_check_branch
        %248 = sbr.rel (%p246) target = $region36
      $region35: #{np_decoder_forward.1} parent=5 // pred_region
        // Predicated region
        $region37: #{np_decoder_forward.1} parent=35 // pred_check
          %p249 = pneg %p50
        $region38: #{np_decoder_forward.1} parent=35 // pred_check_branch
          %251 = sbr.rel (%p249) target = $region40
        $region39: #{np_decoder_forward.1} parent=35 // pred_region
          %p252 = scmp.lt.s32.totalorder %s23, 1
          %s253 = scalar_select %p252, %s23, 1
          %p254 = scmp.lt.s32.totalorder %s24, 0
          %s255 = scalar_select %p254, %s24, 0
          %s256 = sadd.s32 %s255, %s253
          %s257 = smul.addr %s256, 4
          %s258 = scalar_lea.vmem %s0, %s257
        $region40: #{np_decoder_forward.1} parent=35 // pred_fallthru
          _
        // Predicated region
        $region41: #{np_decoder_forward.1} parent=35 // pred_check
          %p259 = pneg %p76
        $region42: #{np_decoder_forward.1} parent=35 // pred_check_branch
          %261 = sbr.rel (%p259) target = $region44
        $region43: #{np_decoder_forward.1} parent=35 // pred_region
          %p262 = scmp.lt.s32.totalorder %s23, 1
          %s263 = scalar_select %p262, %s23, 1
          %s264 = smul.addr %s263, 4
          %s265 = smul.addr %s264, 8
          %s266 = scalar_lea.vmem %s1, %s265
        $region44: #{np_decoder_forward.1} parent=35 // pred_fallthru
          _
      $region36: #{np_decoder_forward.1} parent=5 // pred_fallthru
        _
      %p267 = scmp.le.s32.totalorder 1, %s16
      %p268 = scmp.lt.s32.totalorder %s16, 3
      %p269 = pnand %p267, %p268
      %p270 = pneg %p269
      // Predicated region
      $region45: #{np_decoder_forward.1} parent=5 // pred_check
        _
      $region46: #{np_decoder_forward.1} parent=5 // pred_check_branch
        %272 = sbr.rel (%p269) target = $region48
      $region47: #{np_decoder_forward.1} parent=5 // pred_region
        %s273 = ssub.s32 %s16, 1
        %p274 = scmp.lt.s32.totalorder %s25, 1
        %s275 = scalar_select %p274, %s25, 1
        %p276 = scmp.lt.s32.totalorder %s26, 0
        %s277 = scalar_select %p276, %s26, 0
        %s278 = sadd.s32 %s277, %s275
        %s279 = smul.addr %s278, 4
        %s280 = scalar_lea.vmem %s0, %s279
        %p281 = pneg %p56
        %p282 = pneg %p53
        %p283 = scmp.lt.s32.totalorder %s25, 1
        %s284 = scalar_select %p283, %s25, 1
        %s285 = smul.addr %s284, 4
        %s286 = smul.addr %s285, 8
        %s287 = scalar_lea.vmem %s1, %s286
        %p288 = pneg %p82
        %p289 = pneg %p79
        %p290 = pneg %p103
        %p291 = pneg %p100
        %p292 = pneg %p124
        %p293 = pneg %p121
        %p294 = pneg %p145
        %p295 = pneg %p142
        %p296 = pneg %p166
        %p297 = pneg %p163
        %p298 = pneg %p187
        %p299 = pneg %p184
        %p300 = pneg %p215
        %p301 = pneg %p212
        %s302 = sand.u32 %s202, 1
        %s303 = scalar_lea.sflag [#allocation3], %s302
        %s304 = sand.u32 %s202, 1
        %s305 = smul.addr %s304, 2
        %s306 = scalar_lea.vmem [#allocation2], %s305
        %p307 = scmp.lt.s32.totalorder %s25, 1
        %s308 = scalar_select %p307, %s25, 1
        %p309 = scmp.lt.s32.totalorder %s26, 0
        %s310 = scalar_select %p309, %s26, 0
        %s311 = sadd.s32 %s310, %s308
        %s312 = smul.addr %s311, 4
        %s313 = scalar_lea.vmem %s0, %s312
        %p314 = scmp.lt.s32.totalorder %s25, 1
        %s315 = scalar_select %p314, %s25, 1
        %s316 = smul.addr %s315, 4
        %s317 = smul.addr %s316, 8
        %s318 = scalar_lea.vmem %s1, %s317
        %v319 = vld [vmem:[%s313] sm:$0xf]
        %v320 = vld [vmem:[%s3] sm:$0xff]
        %v321 = vld [vmem:[%s3 + $0x8] sm:$0xff]
        %v322 = vld [vmem:[%s3 + $0x10] sm:$0xff]
        %v323 = vld [vmem:[%s3 + $0x18] sm:$0xff]
        %v324 = vld [vmem:[%s5] sm:$0x3]
        %v325 = vld [vmem:[%s2] sm:$0xff]
        %v326 = vld [vmem:[%s2 + $0x8] sm:$0xff]
        %v327 = vld [vmem:[%s2 + $0x10] sm:$0xff]
        %v328 = vld [vmem:[%s2 + $0x18] sm:$0xff]
        %v329 = vld [vmem:[%s318] sm:$0xff]
        %v330 = vld [vmem:[%s318 + $0x8] sm:$0xff]
        %v331 = vld [vmem:[%s318 + $0x10] sm:$0xff]
        %v332 = vld [vmem:[%s318 + $0x18] sm:$0xff]
        %334 = vset.pattern.permute.xlu0 0
        %335 = vperm.xlu0 %334, %v329
        %v336 = vpop.permute.xlu0 %335
        %339 = vset.pattern.permute.xlu0 0
        %340 = vperm.xlu0 %339, %v330
        %v341 = vpop.permute.xlu0 %340
        %344 = vset.pattern.permute.xlu0 0
        %345 = vperm.xlu0 %344, %v331
        %v346 = vpop.permute.xlu0 %345
        %349 = vset.pattern.permute.xlu0 0
        %350 = vperm.xlu0 %349, %v332
        %v351 = vpop.permute.xlu0 %350
        %vm353 = vcmask 31744
        %v355 = vsel %vm353, %v325, 0
        %v358 = vsel %vm353, %v326, 0
        %v361 = vsel %vm353, %v327, 0
        %v364 = vsel %vm353, %v328, 0
        %vm366 = vcmask 1043456
        %v368 = vsel %vm366, %v319, 0
        %370 = vmatprep.subr.mxu0 0.0
        %371 = vmatpush1.msra.mxu0 0.0
        %372 = vmatprep.subr.mxu0 0.0
        %373 = vmatpush1.msra.mxu0 0.0
        %374 = vmatprep.subr.mxu0 0.0
        %375 = vmatpush1.msra.mxu0 0.0
        %376 = vmatprep.subr.mxu0 0.0
        %377 = vmatpush1.msra.mxu0 0.0
        %378 = vmatprep.subr.mxu0 0.0
        %379 = vmatpush1.msra.mxu0 0.0
        %380 = vmatprep.subr.mxu0 0.0
        %381 = vmatpush1.msra.mxu0 0.0
        %382 = vmatprep.subr.mxu0 0.0
        %383 = vmatpush1.msra.mxu0 0.0
        %384 = vmatprep.subr.mxu0 0.0
        %385 = vmatpush1.msra.mxu0 0.0
        %386 = vmatprep.subr.mxu0 0.0
        %387 = vmatpush1.msra.mxu0 0.0
        %388 = vmatprep.subr.mxu0 0.0
        %389 = vmatpush1.msra.mxu0 0.0
        %390 = vmatprep.subr.mxu0 0.0
        %391 = vmatpush1.msra.mxu0 0.0
        %392 = vmatprep.subr.mxu0 0.0
        %393 = vmatpush1.msra.mxu0 0.0
        %394 = vmatprep.subr.mxu0 0.0
        %395 = vmatpush1.msra.mxu0 0.0
        %396 = vmatprep.subr.mxu0 0.0
        %397 = vmatpush1.msra.mxu0 0.0
        %398 = vmatprep.subr.mxu0 0.0
        %399 = vmatpush1.msra.mxu0 0.0
        %400 = vmatprep.subr.mxu0 0.0
        %401 = vmatpush1.msra.mxu0 %v368
        %402 = vmatprep.subr.mxu0 0.0
        %403 = vmatpush2.msra.mxu0 0.0
        %404 = vmatprep.subr.mxu0 0.0
        %405 = vmatpush2.msra.mxu0 0.0
        %406 = vmatprep.subr.mxu0 0.0
        %407 = vmatpush2.msra.mxu0 0.0
        %408 = vmatprep.subr.mxu0 0.0
        %409 = vmatpush2.msra.mxu0 0.0
        %410 = vmatprep.subr.mxu0 0.0
        %411 = vmatpush2.msra.mxu0 0.0
        %412 = vmatprep.subr.mxu0 0.0
        %413 = vmatpush2.msra.mxu0 0.0
        %414 = vmatprep.subr.mxu0 0.0
        %415 = vmatpush2.msra.mxu0 0.0
        %416 = vmatprep.subr.mxu0 0.0
        %417 = vmatpush2.msra.mxu0 0.0
        %418 = vmatprep.subr.mxu0 0.0
        %419 = vmatpush2.msra.mxu0 0.0
        %420 = vmatprep.subr.mxu0 0.0
        %421 = vmatpush2.msra.mxu0 0.0
        %422 = vmatprep.subr.mxu0 0.0
        %423 = vmatpush2.msra.mxu0 0.0
        %424 = vmatprep.subr.mxu0 0.0
        %425 = vmatpush2.msra.mxu0 0.0
        %426 = vmatprep.subr.mxu0 0.0
        %427 = vmatpush2.msra.mxu0 0.0
        %428 = vmatprep.subr.mxu0 0.0
        %429 = vmatpush2.msra.mxu0 0.0
        %430 = vmatprep.subr.mxu0 0.0
        %431 = vmatpush2.msra.mxu0 0.0
        %432 = vmatprep.subr.mxu0 0.0
        %433 = vmatpush2.msra.mxu0 0.0
        %434 = vmatprep.mubr.f32.mxu0 0.0
        %435 = vmatmul.mubr.f32.gmra.mxu0 %v355
        %v436 = vpop.f32.mrf.mxu0
        %v437 = vadd.f32 %v336, %v436
        %v438 = vpop.f32.mrf.mxu0
        %439 = vmatprep.mubr.f32.mxu0 0.0
        %440 = vmatmul.mubr.f32.gmra.mxu0 %v358
        %v441 = vpop.f32.mrf.mxu0
        %v442 = vadd.f32 %v341, %v441
        %v443 = vpop.f32.mrf.mxu0
        %444 = vmatprep.mubr.f32.mxu0 0.0
        %445 = vmatmul.mubr.f32.gmra.mxu0 %v361
        %v446 = vpop.f32.mrf.mxu0
        %v447 = vadd.f32 %v346, %v446
        %v448 = vpop.f32.mrf.mxu0
        %449 = vmatprep.mubr.f32.mxu0 0.0
        %450 = vmatmul.mubr.f32.gmra.mxu0 %v364
        %v451 = vpop.f32.mrf.mxu0
        %v452 = vadd.f32 %v351, %v451
        %v453 = vpop.f32.mrf.mxu0
        %454 = vdwg.mxu0
        %v455 = vmax.f32 %v437, 0.0
        %v456 = vmax.f32 %v442, 0.0
        %v457 = vmax.f32 %v447, 0.0
        %v458 = vmax.f32 %v452, 0.0
        %v459 = vld [vmem:[%s4] sm:$0xff]
        %v460 = vld [vmem:[%s4 + $0x8] sm:$0xff]
        %v461 = vld [vmem:[%s4 + $0x10] sm:$0xff]
        %v462 = vld [vmem:[%s4 + $0x18] sm:$0xff]
        %464 = vset.pattern.permute.xlu0 0
        %465 = vperm.xlu0 %464, %v459
        %v466 = vpop.permute.xlu0 %465
        %469 = vset.pattern.permute.xlu0 0
        %470 = vperm.xlu0 %469, %v460
        %v471 = vpop.permute.xlu0 %470
        %474 = vset.pattern.permute.xlu0 0
        %475 = vperm.xlu0 %474, %v461
        %v476 = vpop.permute.xlu0 %475
        %479 = vset.pattern.permute.xlu0 0
        %480 = vperm.xlu0 %479, %v462
        %v481 = vpop.permute.xlu0 %480
        %vm483 = vcmask 261120
        %v485 = vsel %vm483, %v320, 0
        %v488 = vsel %vm483, %v321, 0
        %v491 = vsel %vm483, %v322, 0
        %v494 = vsel %vm483, %v323, 0
        %496 = vmatprep.subr.mxu0 0.0
        %497 = vmatpush1.msra.mxu0 0.0
        %498 = vmatprep.subr.mxu0 0.0
        %499 = vmatpush1.msra.mxu0 0.0
        %500 = vmatprep.subr.mxu0 0.0
        %501 = vmatpush1.msra.mxu0 0.0
        %502 = vmatprep.subr.mxu0 0.0
        %503 = vmatpush1.msra.mxu0 0.0
        %504 = vmatprep.subr.mxu0 0.0
        %505 = vmatpush1.msra.mxu0 0.0
        %506 = vmatprep.subr.mxu0 0.0
        %507 = vmatpush1.msra.mxu0 0.0
        %508 = vmatprep.subr.mxu0 0.0
        %509 = vmatpush1.msra.mxu0 0.0
        %510 = vmatprep.subr.mxu0 0.0
        %511 = vmatpush1.msra.mxu0 0.0
        %512 = vmatprep.subr.mxu0 0.0
        %513 = vmatpush1.msra.mxu0 0.0
        %514 = vmatprep.subr.mxu0 0.0
        %515 = vmatpush1.msra.mxu0 0.0
        %516 = vmatprep.subr.mxu0 0.0
        %517 = vmatpush1.msra.mxu0 0.0
        %518 = vmatprep.subr.mxu0 0.0
        %519 = vmatpush1.msra.mxu0 0.0
        %520 = vmatprep.subr.mxu0 0.0
        %521 = vmatpush1.msra.mxu0 %v458
        %522 = vmatprep.subr.mxu0 0.0
        %523 = vmatpush1.msra.mxu0 %v457
        %524 = vmatprep.subr.mxu0 0.0
        %525 = vmatpush1.msra.mxu0 %v456
        %526 = vmatprep.subr.mxu0 0.0
        %527 = vmatpush1.msra.mxu0 %v455
        %528 = vmatprep.subr.mxu0 0.0
        %529 = vmatpush2.msra.mxu0 0.0
        %530 = vmatprep.subr.mxu0 0.0
        %531 = vmatpush2.msra.mxu0 0.0
        %532 = vmatprep.subr.mxu0 0.0
        %533 = vmatpush2.msra.mxu0 0.0
        %534 = vmatprep.subr.mxu0 0.0
        %535 = vmatpush2.msra.mxu0 0.0
        %536 = vmatprep.subr.mxu0 0.0
        %537 = vmatpush2.msra.mxu0 0.0
        %538 = vmatprep.subr.mxu0 0.0
        %539 = vmatpush2.msra.mxu0 0.0
        %540 = vmatprep.subr.mxu0 0.0
        %541 = vmatpush2.msra.mxu0 0.0
        %542 = vmatprep.subr.mxu0 0.0
        %543 = vmatpush2.msra.mxu0 0.0
        %544 = vmatprep.subr.mxu0 0.0
        %545 = vmatpush2.msra.mxu0 0.0
        %546 = vmatprep.subr.mxu0 0.0
        %547 = vmatpush2.msra.mxu0 0.0
        %548 = vmatprep.subr.mxu0 0.0
        %549 = vmatpush2.msra.mxu0 0.0
        %550 = vmatprep.subr.mxu0 0.0
        %551 = vmatpush2.msra.mxu0 0.0
        %552 = vmatprep.subr.mxu0 0.0
        %553 = vmatpush2.msra.mxu0 0.0
        %554 = vmatprep.subr.mxu0 0.0
        %555 = vmatpush2.msra.mxu0 0.0
        %556 = vmatprep.subr.mxu0 0.0
        %557 = vmatpush2.msra.mxu0 0.0
        %558 = vmatprep.subr.mxu0 0.0
        %559 = vmatpush2.msra.mxu0 0.0
        %560 = vmatprep.mubr.f32.mxu0 0.0
        %561 = vmatmul.mubr.f32.gmra.mxu0 %v485
        %v562 = vpop.f32.mrf.mxu0
        %v563 = vadd.f32 %v466, %v562
        %v564 = vpop.f32.mrf.mxu0
        %565 = vmatprep.mubr.f32.mxu0 0.0
        %566 = vmatmul.mubr.f32.gmra.mxu0 %v488
        %v567 = vpop.f32.mrf.mxu0
        %v568 = vadd.f32 %v471, %v567
        %v569 = vpop.f32.mrf.mxu0
        %570 = vmatprep.mubr.f32.mxu0 0.0
        %571 = vmatmul.mubr.f32.gmra.mxu0 %v491
        %v572 = vpop.f32.mrf.mxu0
        %v573 = vadd.f32 %v476, %v572
        %v574 = vpop.f32.mrf.mxu0
        %575 = vmatprep.mubr.f32.mxu0 0.0
        %576 = vmatmul.mubr.f32.gmra.mxu0 %v494
        %v577 = vpop.f32.mrf.mxu0
        %v578 = vadd.f32 %v481, %v577
        %v579 = vpop.f32.mrf.mxu0
        %580 = vdwg.mxu0
        %v581 = vmax.f32 %v563, 0.0
        %v582 = vmax.f32 %v568, 0.0
        %v583 = vmax.f32 %v573, 0.0
        %v584 = vmax.f32 %v578, 0.0
        %v585 = vld [vmem:[%s6] sm:$0x3]
        %587 = vset.pattern.permute.xlu0 0
        %588 = vperm.xlu0 %587, %v585
        %v589 = vpop.permute.xlu0 %588
        %v592 = vsel %vm483, %v324, 0
        %594 = vmatprep.subr.mxu0 0.0
        %595 = vmatpush1.msra.mxu0 0.0
        %596 = vmatprep.subr.mxu0 0.0
        %597 = vmatpush1.msra.mxu0 0.0
        %598 = vmatprep.subr.mxu0 0.0
        %599 = vmatpush1.msra.mxu0 0.0
        %600 = vmatprep.subr.mxu0 0.0
        %601 = vmatpush1.msra.mxu0 0.0
        %602 = vmatprep.subr.mxu0 0.0
        %603 = vmatpush1.msra.mxu0 0.0
        %604 = vmatprep.subr.mxu0 0.0
        %605 = vmatpush1.msra.mxu0 0.0
        %606 = vmatprep.subr.mxu0 0.0
        %607 = vmatpush1.msra.mxu0 0.0
        %608 = vmatprep.subr.mxu0 0.0
        %609 = vmatpush1.msra.mxu0 0.0
        %610 = vmatprep.subr.mxu0 0.0
        %611 = vmatpush1.msra.mxu0 0.0
        %612 = vmatprep.subr.mxu0 0.0
        %613 = vmatpush1.msra.mxu0 0.0
        %614 = vmatprep.subr.mxu0 0.0
        %615 = vmatpush1.msra.mxu0 0.0
        %616 = vmatprep.subr.mxu0 0.0
        %617 = vmatpush1.msra.mxu0 0.0
        %618 = vmatprep.subr.mxu0 0.0
        %619 = vmatpush1.msra.mxu0 %v584
        %620 = vmatprep.subr.mxu0 0.0
        %621 = vmatpush1.msra.mxu0 %v583
        %622 = vmatprep.subr.mxu0 0.0
        %623 = vmatpush1.msra.mxu0 %v582
        %624 = vmatprep.subr.mxu0 0.0
        %625 = vmatpush1.msra.mxu0 %v581
        %626 = vmatprep.subr.mxu0 0.0
        %627 = vmatpush2.msra.mxu0 0.0
        %628 = vmatprep.subr.mxu0 0.0
        %629 = vmatpush2.msra.mxu0 0.0
        %630 = vmatprep.subr.mxu0 0.0
        %631 = vmatpush2.msra.mxu0 0.0
        %632 = vmatprep.subr.mxu0 0.0
        %633 = vmatpush2.msra.mxu0 0.0
        %634 = vmatprep.subr.mxu0 0.0
        %635 = vmatpush2.msra.mxu0 0.0
        %636 = vmatprep.subr.mxu0 0.0
        %637 = vmatpush2.msra.mxu0 0.0
        %638 = vmatprep.subr.mxu0 0.0
        %639 = vmatpush2.msra.mxu0 0.0
        %640 = vmatprep.subr.mxu0 0.0
        %641 = vmatpush2.msra.mxu0 0.0
        %642 = vmatprep.subr.mxu0 0.0
        %643 = vmatpush2.msra.mxu0 0.0
        %644 = vmatprep.subr.mxu0 0.0
        %645 = vmatpush2.msra.mxu0 0.0
        %646 = vmatprep.subr.mxu0 0.0
        %647 = vmatpush2.msra.mxu0 0.0
        %648 = vmatprep.subr.mxu0 0.0
        %649 = vmatpush2.msra.mxu0 0.0
        %650 = vmatprep.subr.mxu0 0.0
        %651 = vmatpush2.msra.mxu0 0.0
        %652 = vmatprep.subr.mxu0 0.0
        %653 = vmatpush2.msra.mxu0 0.0
        %654 = vmatprep.subr.mxu0 0.0
        %655 = vmatpush2.msra.mxu0 0.0
        %656 = vmatprep.subr.mxu0 0.0
        %657 = vmatpush2.msra.mxu0 0.0
        %658 = vmatprep.mubr.f32.mxu0 0.0
        %659 = vmatmul.mubr.f32.gmra.mxu0 %v592
        %v660 = vpop.f32.mrf.mxu0
        %v661 = vadd.f32 %v589, %v660
        %v662 = vpop.f32.mrf.mxu0
        %663 = vdwg.mxu0
        %664 = vst [vmem:[%s306] sm:$0x3] %v661
        %s665 = sand.u32 %s202, 1
        %s666 = scalar_lea.sflag [#allocation3], %s665
        %s667 = sand.u32 %s202, 1
        %s668 = smul.addr %s667, 2
        %s669 = scalar_lea.vmem [#allocation2], %s668
        // Predicated region
        $region49: #{np_decoder_forward.1} parent=47 // pred_check
          %p670 = pneg %p212
        $region50: #{np_decoder_forward.1} parent=47 // pred_check_branch
          %672 = sbr.rel (%p670) target = $region52
        $region51: #{np_decoder_forward.1} parent=47 // pred_region
          %s674 = ssub.s32 32, 32
          %675 = vsyncadd %s666, %s674
          %s676 = sadd.s32 %s26, %s25
          %s677 = smul.addr %s676, 32
          %s678 = scalar_lea.hbm %s7, %s677
          %s680 = sshll.u32 %s669, 4
          %s681 = int_to_ptr.vmem [resolvable:$true] %s680
          %683 = dma.vmem_to_hbm [thread:$0]  %s681, 32, %s678, %s666
        $region52: #{np_decoder_forward.1} parent=47 // pred_fallthru
          _
      $region48: #{np_decoder_forward.1} parent=5 // pred_fallthru
        _
      %p684 = scmp.le.s32.totalorder 2, %s16
      // Predicated region
      $region53: #{np_decoder_forward.1} parent=5 // pred_check
        %p685 = pneg %p684
      $region54: #{np_decoder_forward.1} parent=5 // pred_check_branch
        %687 = sbr.rel (%p685) target = $region56
      $region55: #{np_decoder_forward.1} parent=5 // pred_region
        %s688 = ssub.s32 %s16, 2
        // Predicated region
        $region57: #{np_decoder_forward.1} parent=55 // pred_check
          %p689 = pneg %p218
        $region58: #{np_decoder_forward.1} parent=55 // pred_check_branch
          %691 = sbr.rel (%p689) target = $region60
        $region59: #{np_decoder_forward.1} parent=55 // pred_region
          %s692 = sand.u32 %s203, 1
          %s693 = scalar_lea.sflag [#allocation3], %s692
          %s694 = sand.u32 %s203, 1
          %s695 = smul.addr %s694, 2
          %s696 = scalar_lea.vmem [#allocation2], %s695
          %697 = dma.done %s693, 32
        $region60: #{np_decoder_forward.1} parent=55 // pred_fallthru
          _
      $region56: #{np_decoder_forward.1} parent=5 // pred_fallthru
        _
    $region6: #{np_decoder_forward.1} parent=1 // loop_footer
      %s20 = sadd.s32 1, %s16
    $region7: #{np_decoder_forward.1} parent=1 // loop_footer_branch
      %15 = sbr.rel target = $region3
    $region8: #{np_decoder_forward.1} parent=1 // loop_exit
      _
    %698 = vsyncpa [#allocation3], 1
    %s699 = scalar_lea.sflag [#allocation3], 1
    %700 = vsyncpa %s699, 1

</llo_original>
